<compile_context>
chip_gen: v7x
topology: tpu7x:2x2x1
jax: 0.10.0
libtpu: 0.0.40
codegen_flags: <defaults>
</compile_context>

<pallas_src>
import functools

import jax
import jax.numpy as jnp
from jax.experimental import pallas as pl
from jax.experimental.pallas import tpu as pltpu

ALPHA_1 = 0.001    # weight for the count-error term
ALPHA_2 = 0.0001   # weight for the L1 term
LANES = 128
TILE_R_MAX = 1024      # (1024, 128) f32 tile = 512 KiB per input per buffer
NUM_CORE_SPLITS = 2    # leading "parallel" grid axis (megacore sharding on v7x)


def _round_up(x, m):
    return ((x + m - 1) // m) * m


def _loss_kernel(d_ref, g_ref, out_ref, *, rows, tile_r, steps_per_core):
    """Accumulates per-(sublane, lane) partial sums of diff, diff^2, |diff|.

    out_ref: (1, 3, 8, LANES) f32 block, resident across the inner grid axis
             (same block index for every step of a given core split).
    """
    c = pl.program_id(0)   # core split        ("parallel")
    i = pl.program_id(1)   # row-tile step     ("arbitrary", sequential)

    @pl.when(i == 0)
    def _init():
        out_ref[...] = jnp.zeros_like(out_ref)

    # Global start row of this tile, UNclamped: tail rows of the last block and
    # phantom blocks (whose DMA index was clamped in the index_map) are fully
    # masked to zero here, so they contribute nothing to any sum.
    row0 = (c * steps_per_core + i) * tile_r
    row_in_tile = jax.lax.broadcasted_iota(jnp.int32, (tile_r, LANES), 0)
    valid = row_in_tile < (rows - row0)

    diff = jnp.where(valid, d_ref[...] - g_ref[...], 0.0)
    diff3 = diff.reshape(tile_r // 8, 8, LANES)

    # Per-(sublane, lane) partial accumulation: VPU adds only in the hot loop;
    # the cross-lane reduction is deferred to the tiny epilogue in the wrapper.
    out_ref[0, 0] += jnp.sum(diff3, axis=0)            # sum(d - g)
    out_ref[0, 1] += jnp.sum(diff3 * diff3, axis=0)    # sum((d - g)^2)
    out_ref[0, 2] += jnp.sum(jnp.abs(diff3), axis=0)   # sum(|d - g|)


def build_loss(density_map, gt_data, *, tile_r_max=TILE_R_MAX,
               num_core_splits=NUM_CORE_SPLITS):
    """Pallas equivalent of CrowdCounter_cnterr_l1_out_minibatch.build_loss."""
    assert density_map.shape == gt_data.shape
    n = density_map.size                      # real element count (for means)

    flat_d = density_map.reshape(-1).astype(jnp.float32)
    flat_g = gt_data.reshape(-1).astype(jnp.float32)

    # Lane-dense (rows, 128) slab.  For sizes divisible by 128 (the common case
    # for density maps) this reshape is free -- no extra HBM traffic.
    rem = flat_d.size % LANES
    if rem:
        flat_d = jnp.pad(flat_d, (0, LANES - rem))
        flat_g = jnp.pad(flat_g, (0, LANES - rem))
    rows = flat_d.size // LANES
    d2 = flat_d.reshape(rows, LANES)
    g2 = flat_g.reshape(rows, LANES)

    # Big row tiles to amortize per-grid-step overhead; tile_r stays a multiple
    # of 8 (sublane) and the kernel masks the tail, so no padding to a whole
    # number of tiles is required.
    tile_r = min(tile_r_max, _round_up(rows, 8))
    nblocks = pl.cdiv(rows, tile_r)
    steps_per_core = pl.cdiv(nblocks, num_core_splits)

    def in_map(c, i):
        # Clamp so phantom blocks (odd block counts / tiny inputs) never issue
        # an out-of-bounds DMA; the kernel masks them out by global row index.
        return (jnp.minimum(c * steps_per_core + i, nblocks - 1), 0)

    kernel = functools.partial(
        _loss_kernel, rows=rows, tile_r=tile_r, steps_per_core=steps_per_core)

    partials = pl.pallas_call(
        kernel,
        out_shape=jax.ShapeDtypeStruct(
            (num_core_splits, 3, 8, LANES), jnp.float32),
        grid_spec=pltpu.PrefetchScalarGridSpec(
            num_scalar_prefetch=0,
            grid=(num_core_splits, steps_per_core),
            in_specs=[
                pl.BlockSpec((tile_r, LANES), in_map),
                pl.BlockSpec((tile_r, LANES), in_map),
            ],
            out_specs=pl.BlockSpec(
                (1, 3, 8, LANES), lambda c, i: (c, 0, 0, 0)),
        ),
        compiler_params=pltpu.CompilerParams(
            dimension_semantics=("parallel", "arbitrary")),
    )(d2, g2)

    # Tiny epilogue (a few KiB of data) in plain JAX: combine per-core and
    # per-(sublane, lane) partials, then form the scalar loss.
    sums = jnp.sum(partials, axis=(0, 2, 3))            # (3,)
    sum_diff, sse, sae = sums[0], sums[1], sums[2]
    inv_n = 1.0 / float(n)
    loss_mse = 0.5 * sse * inv_n                        # 0.5 * MSELoss
    loss_l1 = ALPHA_2 * sae * inv_n                     # alpha_2 * L1Loss
    loss_count = ALPHA_1 * jnp.abs(sum_diff)            # alpha_1 * |gt - et|
    return loss_mse + loss_count + loss_l1


class CrowdCounterCntErrL1OutMinibatch:
    """JAX/Pallas port of the PyTorch module (forward + build_loss)."""

    def __init__(self):
        self.alpha_1 = ALPHA_1
        self.alpha_2 = ALPHA_2
        self.loss_all = None
        self.training = True

    @property
    def loss(self):
        return self.loss_all

    def DME(self, im_data):
        # TODO(synk): the DME density-map estimator network is never defined in
        # the reference module's __init__ (no weights/shapes given), so it is
        # treated as an identity passthrough here.
        return im_data

    def forward(self, im_data, gt_data=None, is_training=False):
        # network.np_to_variable_minibatch is just a numpy->tensor conversion;
        # inputs are already jnp arrays here.
        im_data = jnp.asarray(im_data, dtype=jnp.float32)
        density_map = self.DME(im_data)
        if self.training:
            gt_data = jnp.asarray(gt_data, dtype=jnp.float32)
            self.loss_all = build_loss(density_map, gt_data)
        return density_map


def _reference_loss(density_map, gt_data):
    """Pure-JAX reference for validation."""
    d = density_map.astype(jnp.float32)
    g = gt_data.astype(jnp.float32)
    loss_mse = 0.5 * jnp.mean((d - g) ** 2)
    loss_l1 = ALPHA_2 * jnp.mean(jnp.abs(d - g))
    loss_count = ALPHA_1 * jnp.abs(jnp.sum(g) - jnp.sum(d))
    return loss_mse + loss_count + loss_l1


if __name__ == "__main__":
    key = jax.random.PRNGKey(0)
    k_im, k_gt, k2a, k2b, k3a, k3b = jax.random.split(key, 6)

    # --- Primary test: NCHW inputs (batch=2, channels=1, 16x16 spatial) ------
    im_data = jax.random.uniform(k_im, (2, 1, 16, 16), dtype=jnp.float32)
    gt_data = jax.random.uniform(k_gt, (2, 1, 16, 16), dtype=jnp.float32)

    model = CrowdCounterCntErrL1OutMinibatch()
    density_map = model.forward(im_data, gt_data, is_training=True)
    density_map = jax.block_until_ready(density_map)
    loss_val = jax.block_until_ready(model.loss)
    ref = jax.block_until_ready(_reference_loss(density_map, gt_data))
    assert jnp.allclose(loss_val, ref, rtol=1e-4, atol=1e-6), (loss_val, ref)

    # --- Extra check: size not a multiple of 128 + tail-row masking ----------
    d_b = jax.random.uniform(k2a, (2, 1, 37, 53), dtype=jnp.float32)
    g_b = jax.random.uniform(k2b, (2, 1, 37, 53), dtype=jnp.float32)
    loss_b = jax.block_until_ready(build_loss(d_b, g_b, tile_r_max=8))
    ref_b = jax.block_until_ready(_reference_loss(d_b, g_b))
    assert jnp.allclose(loss_b, ref_b, rtol=1e-4, atol=1e-6), (loss_b, ref_b)

    # --- Extra check: odd block count (exercises the clamped phantom block) --
    d_c = jax.random.uniform(k3a, (1, 1, 48, 128), dtype=jnp.float32)
    g_c = jax.random.uniform(k3b, (1, 1, 48, 128), dtype=jnp.float32)
    loss_c = jax.block_until_ready(build_loss(d_c, g_c, tile_r_max=16))
    ref_c = jax.block_until_ready(_reference_loss(d_c, g_c))
    assert jnp.allclose(loss_c, ref_c, rtol=1e-4, atol=1e-6), (loss_c, ref_c)

    print("KERNEL_OK")
</pallas_src>

<mosaic_0001>
module attributes {stable_mosaic.version = 11 : i64} {
  func.func @_loss_kernel(%arg0: i32, %arg1: i32, %arg2: memref<8x128xf32, #tpu.memory_space<vmem>>, %arg3: memref<8x128xf32, #tpu.memory_space<vmem>>, %arg4: memref<1x3x8x128xf32, #tpu.memory_space<vmem>>) attributes {dimension_semantics = [#tpu.dimension_semantics<parallel>, #tpu.dimension_semantics<arbitrary>], iteration_bounds = array<i64: 2, 1>, scalar_prefetch = 0 : i64, scratch_operands = 0 : i64, tpu.core_type = #tpu.core_type<tc>, window_params = [{transform_indices = @transform_0, window_bounds = array<i64: 8, 128>}, {transform_indices = @transform_1, window_bounds = array<i64: 8, 128>}, {transform_indices = @transform_2, window_bounds = array<i64: 1, 3, 8, 128>}]} {
    %c0_i32 = arith.constant 0 : i32
    %0 = arith.cmpi eq, %arg1, %c0_i32 : i32
    %1 = arith.extui %0 : i1 to i32
    %c0_i32_0 = arith.constant 0 : i32
    %2 = arith.cmpi ne, %1, %c0_i32_0 : i32
    scf.if %2 {
      %cst_29 = arith.constant 0.000000e+00 : f32
      %39 = vector.broadcast %cst_29 : f32 to vector<1x3x8x128xf32>
      %c0_30 = arith.constant 0 : index
      %c0_31 = arith.constant 0 : index
      %c0_32 = arith.constant 0 : index
      %c0_33 = arith.constant 0 : index
      %40 = vector.load %arg4[%c0_30, %c0_31, %c0_32, %c0_33] : memref<1x3x8x128xf32, #tpu.memory_space<vmem>>, vector<1x3x8x128xf32>
      tpu.vector_store %arg4[%c0_30, %c0_31, %c0_32, %c0_33], %39 {strides = array<i32>} : memref<1x3x8x128xf32, #tpu.memory_space<vmem>>, vector<1x3x8x128xf32>,
    } else {
    }
    %c1_i32 = arith.constant 1 : i32
    %3 = arith.muli %arg0, %c1_i32 : i32
    %4 = arith.addi %3, %arg1 : i32
    %c8_i32 = arith.constant 8 : i32
    %5 = arith.muli %4, %c8_i32 : i32
    %6 = tpu.iota {dimensions = array<i32: 0>} : vector<8x128xi32>
    %c4_i32 = arith.constant 4 : i32
    %7 = arith.subi %c4_i32, %5 : i32
    %8 = vector.broadcast %7 : i32 to vector<8x128xi32>
    %9 = arith.cmpi slt, %6, %8 : vector<8x128xi32>
    %c0 = arith.constant 0 : index
    %c0_1 = arith.constant 0 : index
    %10 = vector.load %arg2[%c0, %c0_1] : memref<8x128xf32, #tpu.memory_space<vmem>>, vector<8x128xf32>
    %c0_2 = arith.constant 0 : index
    %c0_3 = arith.constant 0 : index
    %11 = vector.load %arg3[%c0_2, %c0_3] : memref<8x128xf32, #tpu.memory_space<vmem>>, vector<8x128xf32>
    %12 = arith.subf %10, %11 : vector<8x128xf32>
    %cst = arith.constant 0.000000e+00 : f32
    %13 = vector.broadcast %cst : f32 to vector<8x128xf32>
    %14 = arith.select %9, %12, %13 : vector<8x128xi1>, vector<8x128xf32>
    %15 = vector.shape_cast %14 : vector<8x128xf32> to vector<1x8x128xf32>
    %c0_4 = arith.constant 0 : index
    %c0_5 = arith.constant 0 : index
    %c0_6 = arith.constant 0 : index
    %c0_7 = arith.constant 0 : index
    %16 = vector.load %arg4[%c0_4, %c0_5, %c0_6, %c0_7] : memref<1x3x8x128xf32, #tpu.memory_space<vmem>>, vector<1x1x8x128xf32>
    %17 = vector.shape_cast %16 : vector<1x1x8x128xf32> to vector<8x128xf32>
    %cst_8 = arith.constant dense<0.000000e+00> : vector<8x128xf32>
    %18 = vector.multi_reduction <add>, %15, %cst_8 [0] : vector<1x8x128xf32> to vector<8x128xf32>
    %19 = arith.addf %17, %18 : vector<8x128xf32>
    %c0_9 = arith.constant 0 : index
    %c0_10 = arith.constant 0 : index
    %c0_11 = arith.constant 0 : index
    %c0_12 = arith.constant 0 : index
    %20 = vector.load %arg4[%c0_9, %c0_10, %c0_11, %c0_12] : memref<1x3x8x128xf32, #tpu.memory_space<vmem>>, vector<1x1x8x128xf32>
    %21 = vector.shape_cast %20 : vector<1x1x8x128xf32> to vector<8x128xf32>
    %22 = vector.shape_cast %19 : vector<8x128xf32> to vector<1x1x8x128xf32>
    tpu.vector_store %arg4[%c0_9, %c0_10, %c0_11, %c0_12], %22 {strides = array<i32>} : memref<1x3x8x128xf32, #tpu.memory_space<vmem>>, vector<1x1x8x128xf32>,
    %c0_13 = arith.constant 0 : index
    %c1 = arith.constant 1 : index
    %c0_14 = arith.constant 0 : index
    %c0_15 = arith.constant 0 : index
    %23 = vector.load %arg4[%c0_13, %c1, %c0_14, %c0_15] : memref<1x3x8x128xf32, #tpu.memory_space<vmem>>, vector<1x1x8x128xf32>
    %24 = vector.shape_cast %23 : vector<1x1x8x128xf32> to vector<8x128xf32>
    %25 = arith.mulf %15, %15 : vector<1x8x128xf32>
    %cst_16 = arith.constant dense<0.000000e+00> : vector<8x128xf32>
    %26 = vector.multi_reduction <add>, %25, %cst_16 [0] : vector<1x8x128xf32> to vector<8x128xf32>
    %27 = arith.addf %24, %26 : vector<8x128xf32>
    %c0_17 = arith.constant 0 : index
    %c1_18 = arith.constant 1 : index
    %c0_19 = arith.constant 0 : index
    %c0_20 = arith.constant 0 : index
    %28 = vector.load %arg4[%c0_17, %c1_18, %c0_19, %c0_20] : memref<1x3x8x128xf32, #tpu.memory_space<vmem>>, vector<1x1x8x128xf32>
    %29 = vector.shape_cast %28 : vector<1x1x8x128xf32> to vector<8x128xf32>
    %30 = vector.shape_cast %27 : vector<8x128xf32> to vector<1x1x8x128xf32>
    tpu.vector_store %arg4[%c0_17, %c1_18, %c0_19, %c0_20], %30 {strides = array<i32>} : memref<1x3x8x128xf32, #tpu.memory_space<vmem>>, vector<1x1x8x128xf32>,
    %c0_21 = arith.constant 0 : index
    %c2 = arith.constant 2 : index
    %c0_22 = arith.constant 0 : index
    %c0_23 = arith.constant 0 : index
    %31 = vector.load %arg4[%c0_21, %c2, %c0_22, %c0_23] : memref<1x3x8x128xf32, #tpu.memory_space<vmem>>, vector<1x1x8x128xf32>
    %32 = vector.shape_cast %31 : vector<1x1x8x128xf32> to vector<8x128xf32>
    %33 = math.absf %15 : vector<1x8x128xf32>
    %cst_24 = arith.constant dense<0.000000e+00> : vector<8x128xf32>
    %34 = vector.multi_reduction <add>, %33, %cst_24 [0] : vector<1x8x128xf32> to vector<8x128xf32>
    %35 = arith.addf %32, %34 : vector<8x128xf32>
    %c0_25 = arith.constant 0 : index
    %c2_26 = arith.constant 2 : index
    %c0_27 = arith.constant 0 : index
    %c0_28 = arith.constant 0 : index
    %36 = vector.load %arg4[%c0_25, %c2_26, %c0_27, %c0_28] : memref<1x3x8x128xf32, #tpu.memory_space<vmem>>, vector<1x1x8x128xf32>
    %37 = vector.shape_cast %36 : vector<1x1x8x128xf32> to vector<8x128xf32>
    %38 = vector.shape_cast %35 : vector<8x128xf32> to vector<1x1x8x128xf32>
    tpu.vector_store %arg4[%c0_25, %c2_26, %c0_27, %c0_28], %38 {strides = array<i32>} : memref<1x3x8x128xf32, #tpu.memory_space<vmem>>, vector<1x1x8x128xf32>,
    return
  }
  func.func @transform_0(%arg0: i32, %arg1: i32) -> (i32, i32) {
    %c1_i32 = arith.constant 1 : i32
    %0 = arith.muli %arg0, %c1_i32 : i32
    %1 = arith.addi %0, %arg1 : i32
    %c0_i32 = arith.constant 0 : i32
    %2 = arith.minsi %1, %c0_i32 : i32
    %c0_i32_0 = arith.constant 0 : i32
    %c0_i32_1 = arith.constant 0 : i32
    return %2, %c0_i32_0 : i32, i32
  }
  func.func @transform_1(%arg0: i32, %arg1: i32) -> (i32, i32) {
    %c1_i32 = arith.constant 1 : i32
    %0 = arith.muli %arg0, %c1_i32 : i32
    %1 = arith.addi %0, %arg1 : i32
    %c0_i32 = arith.constant 0 : i32
    %2 = arith.minsi %1, %c0_i32 : i32
    %c0_i32_0 = arith.constant 0 : i32
    %c0_i32_1 = arith.constant 0 : i32
    return %2, %c0_i32_0 : i32, i32
  }
  func.func @transform_2(%arg0: i32, %arg1: i32) -> (i32, i32, i32, i32) {
    %c0_i32 = arith.constant 0 : i32
    %c0_i32_0 = arith.constant 0 : i32
    %c0_i32_1 = arith.constant 0 : i32
    %c0_i32_2 = arith.constant 0 : i32
    return %arg0, %c0_i32, %c0_i32_0, %c0_i32_1 : i32, i32, i32, i32
  }
}

</mosaic_0001>

<llo_original>
// kernel: tpu_custom_call.1
$region0: #{tpu_custom_call.1}
  #allocation0 [shape = 'u32[]', space=smem, size = 0x4, offset = 0x4, fixed_abs, tag = 'smem constant byte address 0x4 - core index']
  #allocation1 [shape = 'u32[144,128]{1,0:T(1,128)}', space=vmem, size = 0x12000, scoped, tag = 'internal scratch']
  %s0 = inlined_call_operand.hbm [shape: f32[4,128], index: 0, kind: input, shape index: {}]
  %s1 = inlined_call_operand.hbm [shape: f32[4,128], index: 1, kind: input, shape index: {}]
  %s2 = inlined_call_operand.hbm [shape: f32[2,3,8,128], index: 2, kind: output, shape index: {}]
  %s3 = sld [smem:[#allocation0]]
  $region53: #{tpu_custom_call.1} parent=0
    _
  %s5 = ssub.s32 1, %s3
  %s6 = scalar_select 0, %s5, %s3
  $region1: #{tpu_custom_call.1} parent=0
    #allocation2 [shape = 'u8[8192]{0}', space=vmem, size = 0x2000, scoped, tag = 'input window, operand 0']
    #allocation3 [shape = 's32[2]{0}', space=sflag, size = 0x8, scoped, tag = 'scoped memory for tpu_custom_call.1']
    #allocation4 [shape = 's32[2]{0}', space=sflag, size = 0x8, scoped, tag = 'scoped memory for tpu_custom_call.1']
    #allocation5 [shape = 'u8[8192]{0}', space=vmem, size = 0x2000, scoped, tag = 'input window, operand 1']
    #allocation6 [shape = 's32[2]{0}', space=sflag, size = 0x8, scoped, tag = 'scoped memory for tpu_custom_call.1']
    #allocation7 [shape = 'u8[24576]{0}', space=vmem, size = 0x6000, scoped, tag = 'output window, operand 0']
    %7 = vsyncpa [#allocation3], 0
    %s8 = scalar_lea.sflag [#allocation3], 1
    %9 = vsyncpa %s8, 0
    %10 = vsyncpa [#allocation6], 0
    %s11 = scalar_lea.sflag [#allocation6], 1
    %12 = vsyncpa %s11, 0
    %13 = vsyncpa [#allocation4], 0
    %s14 = scalar_lea.sflag [#allocation4], 1
    %15 = vsyncpa %s14, 0
    loop: start=0, step=1, limit=4
    $region2: #{tpu_custom_call.1} parent=1 // loop_pre_header
      _
    $region3: #{tpu_custom_call.1} parent=1 // loop_header
      %s17 = sphi 0, %s21
      %p18 = scmp.ge.s32.totalorder %s17, 4
      %s24 = sphi 0, %s36
      %s25 = sphi 0, %s32
      %s26 = sphi 0, %s24
      %s27 = sphi 0, %s25
      %s28 = sphi 0, %s26
      %s29 = sphi 0, %s27
      %s45 = sphi 0, %s47
      %s48 = sphi 0, %s45
      %s49 = sphi 0, %s48
      %s65 = sphi 0, %s49
      %s77 = sphi 0, %s79
      %s80 = sphi 0, %s77
      %s81 = sphi 0, %s80
      %s97 = sphi 0, %s81
      %s103 = sphi 0, %s105
      %s106 = sphi 0, %s103
      %s107 = sphi 0, %s106
      %s123 = sphi 0, %s107
    $region4: #{tpu_custom_call.1} parent=1 // loop_header_branch
      %20 = sbr.rel (%p18) target = $region8
    $region5: #{tpu_custom_call.1} parent=1 // loop_body
      %s22 = ssub.s32 %s17, 1
      %s23 = ssub.s32 %s17, 2
      %s30 = sadd.s32 1, %s25
      %p31 = scmp.ge.s32.totalorder %s30, 1
      %s32 = scalar_select %p31, 0, %s30
      %s33 = sadd.s32 1, %s24
      %s34 = scalar_select %p31, %s33, %s24
      %p35 = scmp.ge.s32.totalorder %s34, 2
      %s36 = scalar_select %p35, 0, %s34
      %s37 = sadd.s32 %s24, %s25
      %p38 = scmp.lt.s32.totalorder %s37, 0
      %s39 = scalar_select %p38, %s37, 0
      %s40 = sadd.s32 %s36, %s32
      %p41 = scmp.lt.s32.totalorder %s40, 0
      %s42 = scalar_select %p41, %s40, 0
      %s43 = ssub.s32 %s39, %s42
      %p44 = scmp.eq.s32.totalorder %s43, 0
      %s46 = sadd.s32 %s45, 1
      %s47 = scalar_select %p44, %s45, %s46
      %p50 = pneg %p44
      %p51 = scmp.eq.s32.totalorder %s17, 1
      %p52 = por %p50, %p51
      %p53 = scmp.ne.s32.totalorder %s45, %s48
      %p54 = scmp.eq.s32.totalorder %s17, 0
      %p55 = por %p53, %p54
      %p56 = scmp.ne.s32.totalorder %s45, %s48
      %p57 = scmp.eq.s32.totalorder %s22, 1
      %p58 = por %p56, %p57
      %p59 = scmp.ne.s32.totalorder %s48, %s49
      %p60 = scmp.eq.s32.totalorder %s22, 0
      %p61 = por %p59, %p60
      %p62 = scmp.ne.s32.totalorder %s48, %s49
      %p63 = scmp.eq.s32.totalorder %s23, 1
      %p64 = por %p62, %p63
      %p66 = scmp.ne.s32.totalorder %s49, %s65
      %p67 = scmp.eq.s32.totalorder %s23, 0
      %p68 = por %p66, %p67
      %s69 = sadd.s32 %s24, %s25
      %p70 = scmp.lt.s32.totalorder %s69, 0
      %s71 = scalar_select %p70, %s69, 0
      %s72 = sadd.s32 %s36, %s32
      %p73 = scmp.lt.s32.totalorder %s72, 0
      %s74 = scalar_select %p73, %s72, 0
      %s75 = ssub.s32 %s71, %s74
      %p76 = scmp.eq.s32.totalorder %s75, 0
      %s78 = sadd.s32 %s77, 1
      %s79 = scalar_select %p76, %s77, %s78
      %p82 = pneg %p76
      %p83 = scmp.eq.s32.totalorder %s17, 1
      %p84 = por %p82, %p83
      %p85 = scmp.ne.s32.totalorder %s77, %s80
      %p86 = scmp.eq.s32.totalorder %s17, 0
      %p87 = por %p85, %p86
      %p88 = scmp.ne.s32.totalorder %s77, %s80
      %p89 = scmp.eq.s32.totalorder %s22, 1
      %p90 = por %p88, %p89
      %p91 = scmp.ne.s32.totalorder %s80, %s81
      %p92 = scmp.eq.s32.totalorder %s22, 0
      %p93 = por %p91, %p92
      %p94 = scmp.ne.s32.totalorder %s80, %s81
      %p95 = scmp.eq.s32.totalorder %s23, 1
      %p96 = por %p94, %p95
      %p98 = scmp.ne.s32.totalorder %s81, %s97
      %p99 = scmp.eq.s32.totalorder %s23, 0
      %p100 = por %p98, %p99
      %s101 = ssub.s32 %s24, %s36
      %p102 = scmp.eq.s32.totalorder %s101, 0
      %s104 = sadd.s32 %s103, 1
      %s105 = scalar_select %p102, %s103, %s104
      %p108 = pneg %p102
      %p109 = scmp.eq.s32.totalorder %s17, 1
      %p110 = por %p108, %p109
      %p111 = scmp.ne.s32.totalorder %s103, %s106
      %p112 = scmp.eq.s32.totalorder %s17, 0
      %p113 = por %p111, %p112
      %p114 = scmp.ne.s32.totalorder %s103, %s106
      %p115 = scmp.eq.s32.totalorder %s22, 1
      %p116 = por %p114, %p115
      %p117 = scmp.ne.s32.totalorder %s106, %s107
      %p118 = scmp.eq.s32.totalorder %s22, 0
      %p119 = por %p117, %p118
      %p120 = scmp.ne.s32.totalorder %s106, %s107
      %p121 = scmp.eq.s32.totalorder %s23, 1
      %p122 = por %p120, %p121
      %p124 = scmp.ne.s32.totalorder %s107, %s123
      %p125 = scmp.eq.s32.totalorder %s23, 0
      %p126 = por %p124, %p125
      %p127 = scmp.le.s32.totalorder 1, %s17
      %p128 = scmp.lt.s32.totalorder %s17, 3
      %p129 = pnand %p127, %p128
      %p130 = pneg %p129
      // Predicated region
      $region9: #{tpu_custom_call.1} parent=5 // pred_check
        _
      $region10: #{tpu_custom_call.1} parent=5 // pred_check_branch
        %132 = sbr.rel (%p129) target = $region12
      $region11: #{tpu_custom_call.1} parent=5 // pred_region
        %s133 = ssub.s32 %s17, 1
      $region12: #{tpu_custom_call.1} parent=5 // pred_fallthru
        _
      %p134 = scmp.lt.s32.totalorder %s17, 2
      // Predicated region
      $region13: #{tpu_custom_call.1} parent=5 // pred_check
        %p135 = pneg %p134
      $region14: #{tpu_custom_call.1} parent=5 // pred_check_branch
        %137 = sbr.rel (%p135) target = $region16
      $region15: #{tpu_custom_call.1} parent=5 // pred_region
        // Predicated region
        $region17: #{tpu_custom_call.1} parent=15 // pred_check
          %p138 = pneg %p55
        $region18: #{tpu_custom_call.1} parent=15 // pred_check_branch
          %140 = sbr.rel (%p138) target = $region20
        $region19: #{tpu_custom_call.1} parent=15 // pred_region
          %s141 = sand.u32 %s45, 1
          %s142 = scalar_lea.sflag [#allocation3], %s141
          %s143 = sand.u32 %s45, 1
          %s144 = smul.addr %s143, 8
          %s145 = scalar_lea.vmem [#allocation2], %s144
          %s146 = sadd.s32 %s24, %s25
          %p147 = scmp.lt.s32.totalorder %s146, 0
          %s148 = scalar_select %p147, %s146, 0
          %s149 = smul.u32 2, %s148
          %s150 = ssub.s32 1, %s149
          %s151 = smul.u32 64, %s150
          %s153 = ssub.s32 128, %s151
          %154 = vsyncadd %s142, %s153
          %p155 = scmp.ne.s32.totalorder 0, %s151
          %s156 = smul.addr %s149, 64
          %s157 = scalar_lea.hbm %s0, %s156
          %s158 = smul.u32 4, %s150
          %s159 = sshll.u32 %s145, 4
          %s160 = int_to_ptr.vmem [resolvable:$true] %s159
          %s161 = sshll.u32 %s158, 4
          %165 = dma.hbm_to_vmem [thread:$0]  (%p155), %s157, %s161, %s160, %s142, 64, 64, 4
        $region20: #{tpu_custom_call.1} parent=15 // pred_fallthru
          _
        // Predicated region
        $region21: #{tpu_custom_call.1} parent=15 // pred_check
          %p166 = pneg %p87
        $region22: #{tpu_custom_call.1} parent=15 // pred_check_branch
          %168 = sbr.rel (%p166) target = $region24
        $region23: #{tpu_custom_call.1} parent=15 // pred_region
          %s169 = sand.u32 %s77, 1
          %s170 = scalar_lea.sflag [#allocation6], %s169
          %s171 = sand.u32 %s77, 1
          %s172 = smul.addr %s171, 8
          %s173 = scalar_lea.vmem [#allocation5], %s172
          %s174 = sadd.s32 %s24, %s25
          %p175 = scmp.lt.s32.totalorder %s174, 0
          %s176 = scalar_select %p175, %s174, 0
          %s177 = smul.u32 2, %s176
          %s178 = ssub.s32 1, %s177
          %s179 = smul.u32 64, %s178
          %s181 = ssub.s32 128, %s179
          %182 = vsyncadd %s170, %s181
          %p183 = scmp.ne.s32.totalorder 0, %s179
          %s184 = smul.addr %s177, 64
          %s185 = scalar_lea.hbm %s1, %s184
          %s186 = smul.u32 4, %s178
          %s187 = sshll.u32 %s173, 4
          %s188 = int_to_ptr.vmem [resolvable:$true] %s187
          %s189 = sshll.u32 %s186, 4
          %193 = dma.hbm_to_vmem [thread:$0]  (%p183), %s185, %s189, %s188, %s170, 64, 64, 4
        $region24: #{tpu_custom_call.1} parent=15 // pred_fallthru
          _
      $region16: #{tpu_custom_call.1} parent=5 // pred_fallthru
        _
      %p194 = scmp.le.s32.totalorder 1, %s17
      %p195 = scmp.lt.s32.totalorder %s17, 3
      %p196 = pnand %p194, %p195
      %p197 = pneg %p196
      // Predicated region
      $region25: #{tpu_custom_call.1} parent=5 // pred_check
        _
      $region26: #{tpu_custom_call.1} parent=5 // pred_check_branch
        %199 = sbr.rel (%p196) target = $region28
      $region27: #{tpu_custom_call.1} parent=5 // pred_region
        %s200 = ssub.s32 %s17, 1
        %s201 = sand.u32 %s48, 1
        %s202 = scalar_lea.sflag [#allocation3], %s201
        %s203 = sand.u32 %s48, 1
        %s204 = smul.addr %s203, 8
        %s205 = scalar_lea.vmem [#allocation2], %s204
        // Predicated region
        $region29: #{tpu_custom_call.1} parent=27 // pred_check
          %p206 = pneg %p61
        $region30: #{tpu_custom_call.1} parent=27 // pred_check_branch
          %208 = sbr.rel (%p206) target = $region32
        $region31: #{tpu_custom_call.1} parent=27 // pred_region
          %209 = dma.done %s202, 128
        $region32: #{tpu_custom_call.1} parent=27 // pred_fallthru
          _
        %s210 = sand.u32 %s80, 1
        %s211 = scalar_lea.sflag [#allocation6], %s210
        %s212 = sand.u32 %s80, 1
        %s213 = smul.addr %s212, 8
        %s214 = scalar_lea.vmem [#allocation5], %s213
        // Predicated region
        $region33: #{tpu_custom_call.1} parent=27 // pred_check
          %p215 = pneg %p93
        $region34: #{tpu_custom_call.1} parent=27 // pred_check_branch
          %217 = sbr.rel (%p215) target = $region36
        $region35: #{tpu_custom_call.1} parent=27 // pred_region
          %218 = dma.done %s211, 128
        $region36: #{tpu_custom_call.1} parent=27 // pred_fallthru
          _
        %s219 = sand.u32 %s48, 1
        %s220 = scalar_lea.sflag [#allocation3], %s219
        %s221 = sand.u32 %s48, 1
        %s222 = smul.addr %s221, 8
        %s223 = scalar_lea.vmem [#allocation2], %s222
        %p224 = pneg %p61
        %p225 = pneg %p58
        %s226 = sand.u32 %s80, 1
        %s227 = scalar_lea.sflag [#allocation6], %s226
        %s228 = sand.u32 %s80, 1
        %s229 = smul.addr %s228, 8
        %s230 = scalar_lea.vmem [#allocation5], %s229
        %p231 = pneg %p93
        %p232 = pneg %p90
        %p233 = pneg %p119
        %p234 = pneg %p116
        %s235 = sand.u32 %s106, 1
        %s236 = scalar_lea.sflag [#allocation4], %s235
        %s237 = sand.u32 %s106, 1
        %s238 = smul.addr %s237, 24
        %s239 = scalar_lea.vmem [#allocation7], %s238
        %s240 = sadd.s32 %s26, %s27
        %p241 = scmp.lt.s32.totalorder %s240, 0
        %s242 = scalar_select %p241, %s240, 0
        %s243 = smul.u32 2, %s242
        %s244 = ssub.s32 1, %s243
        %s245 = smul.u32 64, %s244
        %s246 = sadd.s32 %s26, %s27
        %p247 = scmp.lt.s32.totalorder %s246, 0
        %s248 = scalar_select %p247, %s246, 0
        %s249 = smul.u32 2, %s248
        %s250 = ssub.s32 1, %s249
        %s251 = smul.u32 64, %s250
        %p252 = scmp.eq.s32.totalorder %s27, 0
        // Predicated region
        $region37: #{tpu_custom_call.1} parent=27 // pred_check
          %p253 = pneg %p252
        $region38: #{tpu_custom_call.1} parent=27 // pred_check_branch
          %255 = sbr.rel (%p253) target = $region40
        $region39: #{tpu_custom_call.1} parent=27 // pred_region
          %256 = vst [vmem:[%s239] sm:$0xff] 0.0
          %257 = vst [vmem:[%s239 + $0x8] sm:$0xff] 0.0
          %258 = vst [vmem:[%s239 + $0x10] sm:$0xff] 0.0
        $region40: #{tpu_custom_call.1} parent=27 // pred_fallthru
          _
        %s259 = sadd.s32 %s26, %s27
        %s260 = smul.u32 %s259, 8
        %v261 = vlaneseq
        %v262 = vshrl.u32 %v261, 7
        %s263 = ssub.s32 4, %s260
        %v264 = vstv %s263
        %vm265 = vcmp.lt.s32.totalorder %v262, %v264
        %v266 = vld [vmem:[%s205] sm:$0xff]
        %v267 = vld [vmem:[%s214] sm:$0xff]
        %v268 = vsub.f32 %v266, %v267
        %v269 = vsel %vm265, %v268, 0.0
        %v270 = vld [vmem:[%s239] sm:$0xff]
        %v271 = vadd.f32 %v269, 0.0
        %v272 = vadd.f32 %v270, %v271
        %273 = vst [vmem:[%s239] sm:$0xff] %v272
        %s274 = scalar_lea.vmem %s239, 8 [#allocation7]
        %v275 = vld [vmem:[%s274] sm:$0xff]
        %v276 = vmul.f32 %v269, %v269
        %v277 = vadd.f32 %v276, 0.0
        %v278 = vadd.f32 %v275, %v277
        %279 = vst [vmem:[%s274] sm:$0xff] %v278
        %s280 = scalar_lea.vmem %s239, 16 [#allocation7]
        %v281 = vld [vmem:[%s280] sm:$0xff]
        %v282 = vand.u32 2147483647, %v269
        %v283 = vadd.f32 %v282, 0.0
        %v284 = vadd.f32 %v281, %v283
        %285 = vst [vmem:[%s280] sm:$0xff] %v284
        %s286 = sand.u32 %s106, 1
        %s287 = scalar_lea.sflag [#allocation4], %s286
        %s288 = sand.u32 %s106, 1
        %s289 = smul.addr %s288, 24
        %s290 = scalar_lea.vmem [#allocation7], %s289
        // Predicated region
        $region41: #{tpu_custom_call.1} parent=27 // pred_check
          %p291 = pneg %p116
        $region42: #{tpu_custom_call.1} parent=27 // pred_check_branch
          %293 = sbr.rel (%p291) target = $region44
        $region43: #{tpu_custom_call.1} parent=27 // pred_region
          %s295 = ssub.s32 384, 384
          %296 = vsyncadd %s287, %s295
          %s297 = smul.addr %s26, 3
          %s298 = smul.addr %s297, 128
          %s299 = scalar_lea.hbm %s2, %s298
          %s300 = sshll.u32 %s290, 4
          %s301 = int_to_ptr.vmem [resolvable:$true] %s300
          %306 = dma.vmem_to_hbm [thread:$0]  %s301, 384, %s299, %s287, 128, 128, 8
        $region44: #{tpu_custom_call.1} parent=27 // pred_fallthru
          _
      $region28: #{tpu_custom_call.1} parent=5 // pred_fallthru
        _
      %p307 = scmp.le.s32.totalorder 2, %s17
      // Predicated region
      $region45: #{tpu_custom_call.1} parent=5 // pred_check
        %p308 = pneg %p307
      $region46: #{tpu_custom_call.1} parent=5 // pred_check_branch
        %310 = sbr.rel (%p308) target = $region48
      $region47: #{tpu_custom_call.1} parent=5 // pred_region
        %s311 = ssub.s32 %s17, 2
        // Predicated region
        $region49: #{tpu_custom_call.1} parent=47 // pred_check
          %p312 = pneg %p122
        $region50: #{tpu_custom_call.1} parent=47 // pred_check_branch
          %314 = sbr.rel (%p312) target = $region52
        $region51: #{tpu_custom_call.1} parent=47 // pred_region
          %s315 = sand.u32 %s107, 1
          %s316 = scalar_lea.sflag [#allocation4], %s315
          %s317 = sand.u32 %s107, 1
          %s318 = smul.addr %s317, 24
          %s319 = scalar_lea.vmem [#allocation7], %s318
          %320 = dma.done %s316, 384
        $region52: #{tpu_custom_call.1} parent=47 // pred_fallthru
          _
      $region48: #{tpu_custom_call.1} parent=5 // pred_fallthru
        _
    $region6: #{tpu_custom_call.1} parent=1 // loop_footer
      %s21 = sadd.s32 1, %s17
    $region7: #{tpu_custom_call.1} parent=1 // loop_footer_branch
      %16 = sbr.rel target = $region3
    $region8: #{tpu_custom_call.1} parent=1 // loop_exit
      _
    %321 = vsyncpa [#allocation3], 1
    %s322 = scalar_lea.sflag [#allocation3], 1
    %323 = vsyncpa %s322, 1
    %324 = vsyncpa [#allocation6], 1
    %s325 = scalar_lea.sflag [#allocation6], 1
    %326 = vsyncpa %s325, 1
    %327 = vsyncpa [#allocation4], 1
    %s328 = scalar_lea.sflag [#allocation4], 1
    %329 = vsyncpa %s328, 1

</llo_original>
